<compile_context>
chip_gen: v7x
topology: tpu7x:2x2x1
jax: 0.10.0
libtpu: 0.0.40
codegen_flags: <defaults>
</compile_context>

<pallas_src>
import functools

import jax
import jax.numpy as jnp
from jax.experimental import pallas as pl
from jax.experimental.pallas import tpu as pltpu

LANE = 128      # lane width / MXU column granularity
SUBLANE = 8     # f32 sublane granularity


def _round_up(n, m):
    return ((n + m - 1) // m) * m


def _pad_axis(a, axis, new_size):
    pad = [(0, 0)] * a.ndim
    pad[axis] = (0, new_size - a.shape[axis])
    return jnp.pad(a, pad)


def _mlp_kernel(x_ref, w_in_ref, b_in_ref, w_res_ref, b_res_ref,
                w_out_ref, b_out_ref, out_ref, *, num_res_layers):
    # x_ref: (TILE_B, D_pad) bf16; weights bf16; biases f32 and lane-aligned 2D.

    # input layer: Linear(D -> H_pad) + ReLU   (bf16 MXU, f32 accumulate)
    h = jnp.dot(x_ref[...], w_in_ref[...], preferred_element_type=jnp.float32)
    h = jnp.maximum(h + b_in_ref[...], 0.0)                 # f32 (TILE_B, H_pad)

    # residual blocks: h = relu(h @ W + b) + h
    # (static short unrolled loop; padded hidden columns stay exactly 0:
    #  relu(0 + 0) + 0 == 0, so padding never leaks into real lanes)
    for l in range(num_res_layers):
        residual = h
        y = jnp.dot(h.astype(jnp.bfloat16), w_res_ref[l],
                    preferred_element_type=jnp.float32)
        y = jnp.maximum(y + b_res_ref[l], 0.0)               # b_res_ref[l]: (1, H_pad)
        h = y + residual

    # output layer: Linear(H_pad -> C_pad), lane-dense (128-wide) store
    logits = jnp.dot(h.astype(jnp.bfloat16), w_out_ref[...],
                     preferred_element_type=jnp.float32)
    out_ref[...] = (logits + b_out_ref[...]).astype(out_ref.dtype)


def mlp_classifier_deep_residual(x_nchw, params, *, num_layers, tile_b=SUBLANE):
    """Full forward pass in one Pallas kernel with a batch grid."""
    w_in, b_in, w_res, b_res, w_out, b_out = params
    num_res = num_layers - 2
    num_classes = w_out.shape[1]

    batch = x_nchw.shape[0]
    d = w_in.shape[0]
    h_dim = w_in.shape[1]

    # ---- pad everything to MXU / vreg-friendly shapes (wrapper-side) ----
    b_pad = _round_up(batch, tile_b)
    d_pad = _round_up(d, LANE)
    h_pad = _round_up(h_dim, LANE)
    c_pad = _round_up(num_classes, LANE)

    # nn.Flatten on NCHW: row-major flatten over (C, H, W)
    x_flat = x_nchw.reshape(batch, -1).astype(jnp.float32)
    x_flat = _pad_axis(_pad_axis(x_flat, 0, b_pad), 1, d_pad).astype(jnp.bfloat16)

    # zero-padded weights (bf16 MXU inputs); biases stay f32 and 2D (1, lanes)
    w_in_p = _pad_axis(_pad_axis(w_in, 0, d_pad), 1, h_pad).astype(jnp.bfloat16)
    b_in_p = _pad_axis(b_in.reshape(1, h_dim), 1, h_pad).astype(jnp.float32)
    w_res_p = _pad_axis(_pad_axis(w_res, 1, h_pad), 2, h_pad).astype(jnp.bfloat16)
    b_res_p = _pad_axis(b_res.reshape(num_res, 1, h_dim), 2, h_pad).astype(jnp.float32)
    w_out_p = _pad_axis(_pad_axis(w_out, 0, h_pad), 1, c_pad).astype(jnp.bfloat16)
    b_out_p = _pad_axis(b_out.reshape(1, num_classes), 1, c_pad).astype(jnp.float32)

    kernel = functools.partial(_mlp_kernel, num_res_layers=num_res)

    # Batch grid: x / logits stream per tile (auto double-buffered); all
    # weights use constant index_maps so they stay VMEM-resident.
    # NOTE: at realistic input_dim / very deep stacks, w_in would need a
    # K-reduction grid axis and w_res a per-layer streamed BlockSpec; at these
    # sizes everything fits comfortably in VMEM.
    grid = (b_pad // tile_b,)
    in_specs = [
        pl.BlockSpec((tile_b, d_pad), lambda i: (i, 0)),           # x tile
        pl.BlockSpec((d_pad, h_pad), lambda i: (0, 0)),            # w_in
        pl.BlockSpec((1, h_pad), lambda i: (0, 0)),                # b_in
        pl.BlockSpec((num_res, h_pad, h_pad), lambda i: (0, 0, 0)),  # w_res stack
        pl.BlockSpec((num_res, 1, h_pad), lambda i: (0, 0, 0)),    # b_res stack
        pl.BlockSpec((h_pad, c_pad), lambda i: (0, 0)),            # w_out
        pl.BlockSpec((1, c_pad), lambda i: (0, 0)),                # b_out
    ]
    out_specs = pl.BlockSpec((tile_b, c_pad), lambda i: (i, 0))

    logits_pad = pl.pallas_call(
        kernel,
        out_shape=jax.ShapeDtypeStruct((b_pad, c_pad), jnp.float32),
        grid=grid,
        in_specs=in_specs,
        out_specs=out_specs,
        compiler_params=pltpu.CompilerParams(
            dimension_semantics=("parallel",),     # megacore-friendly (v7x: 2 TCs)
            vmem_limit_bytes=32 * 1024 * 1024,
        ),
    )(x_flat, w_in_p, b_in_p, w_res_p, b_res_p, w_out_p, b_out_p)

    # drop padded batch rows and padded class lanes
    return logits_pad[:batch, :num_classes]


def init_params(key, input_dim, hidden_dim, num_classes, num_layers):
    """Deterministic init mimicking torch.nn.Linear default (U[-1/sqrt(fan_in), +])."""
    num_res = num_layers - 2
    ks = jax.random.split(key, 6)

    def unif(k, shape, fan_in):
        bound = 1.0 / jnp.sqrt(fan_in)
        return jax.random.uniform(k, shape, jnp.float32, -bound, bound)

    w_in = unif(ks[0], (input_dim, hidden_dim), input_dim)
    b_in = unif(ks[1], (hidden_dim,), input_dim)
    w_res = unif(ks[2], (num_res, hidden_dim, hidden_dim), hidden_dim)
    b_res = unif(ks[3], (num_res, hidden_dim), hidden_dim)
    w_out = unif(ks[4], (hidden_dim, num_classes), hidden_dim)
    b_out = unif(ks[5], (num_classes,), hidden_dim)
    return (w_in, b_in, w_res, b_res, w_out, b_out)


def reference_forward(x_nchw, params, *, num_layers):
    """Pure-JAX reference matching the PyTorch semantics, mirroring the
    kernel's bf16 MXU operands (f32 accumulation, f32 bias/ReLU/residual)."""
    w_in, b_in, w_res, b_res, w_out, b_out = params
    batch = x_nchw.shape[0]

    def bf16(a):
        return a.astype(jnp.bfloat16).astype(jnp.float32)

    x = bf16(x_nchw.reshape(batch, -1))
    h = jnp.maximum(x @ bf16(w_in) + b_in, 0.0)
    for l in range(num_layers - 2):
        residual = h
        h = jnp.maximum(bf16(h) @ bf16(w_res[l]) + b_res[l], 0.0) + residual
    return bf16(h) @ bf16(w_out) + b_out


if __name__ == "__main__":
    # Small shapes consistent with the module: batch=2, 3-channel 16x16 images,
    # hidden_dim=32, num_classes=6, num_layers=4 (=> 2 residual layers).
    B, C, H, W = 2, 3, 16, 16
    HIDDEN = 32
    NUM_CLASSES = 6
    NUM_LAYERS = 4
    INPUT_DIM = C * H * W

    key = jax.random.PRNGKey(0)
    k_x, k_p = jax.random.split(key)
    x = jax.random.normal(k_x, (B, C, H, W), jnp.float32)
    params = init_params(k_p, INPUT_DIM, HIDDEN, NUM_CLASSES, NUM_LAYERS)

    logits = mlp_classifier_deep_residual(x, params, num_layers=NUM_LAYERS)
    logits = jax.block_until_ready(logits)

    ref = reference_forward(x, params, num_layers=NUM_LAYERS)
    assert logits.shape == (B, NUM_CLASSES)
    assert jnp.allclose(logits, ref, atol=2e-3, rtol=2e-3), (
        float(jnp.max(jnp.abs(logits - ref))))

    print("KERNEL_OK")
</pallas_src>

<mosaic_0001>
module attributes {stable_mosaic.version = 11 : i64} {
  func.func @_mlp_kernel(%arg0: i32, %arg1: memref<8x768xbf16, #tpu.memory_space<vmem>>, %arg2: memref<768x128xbf16, #tpu.memory_space<vmem>>, %arg3: memref<1x128xf32, #tpu.memory_space<vmem>>, %arg4: memref<2x128x128xbf16, #tpu.memory_space<vmem>>, %arg5: memref<2x1x128xf32, #tpu.memory_space<vmem>>, %arg6: memref<128x128xbf16, #tpu.memory_space<vmem>>, %arg7: memref<1x128xf32, #tpu.memory_space<vmem>>, %arg8: memref<8x128xf32, #tpu.memory_space<vmem>>) attributes {dimension_semantics = [#tpu.dimension_semantics<parallel>], iteration_bounds = array<i64: 1>, scalar_prefetch = 0 : i64, scratch_operands = 0 : i64, tpu.core_type = #tpu.core_type<tc>, window_params = [{transform_indices = @transform_0, window_bounds = array<i64: 8, 768>}, {pipeline_mode = #tpu.pipeline_mode<synchronous>, transform_indices = @transform_1, window_bounds = array<i64: 768, 128>}, {pipeline_mode = #tpu.pipeline_mode<synchronous>, transform_indices = @transform_2, window_bounds = array<i64: 1, 128>}, {pipeline_mode = #tpu.pipeline_mode<synchronous>, transform_indices = @transform_3, window_bounds = array<i64: 2, 128, 128>}, {pipeline_mode = #tpu.pipeline_mode<synchronous>, transform_indices = @transform_4, window_bounds = array<i64: 2, 1, 128>}, {pipeline_mode = #tpu.pipeline_mode<synchronous>, transform_indices = @transform_5, window_bounds = array<i64: 128, 128>}, {pipeline_mode = #tpu.pipeline_mode<synchronous>, transform_indices = @transform_6, window_bounds = array<i64: 1, 128>}, {transform_indices = @transform_7, window_bounds = array<i64: 8, 128>}]} {
    %c0 = arith.constant 0 : index
    %c0_0 = arith.constant 0 : index
    %0 = vector.load %arg1[%c0, %c0_0] : memref<8x768xbf16, #tpu.memory_space<vmem>>, vector<8x768xbf16>
    %c0_1 = arith.constant 0 : index
    %c0_2 = arith.constant 0 : index
    %1 = vector.load %arg2[%c0_1, %c0_2] : memref<768x128xbf16, #tpu.memory_space<vmem>>, vector<768x128xbf16>
    %cst = arith.constant dense<0.000000e+00> : vector<8x128xf32>
    %2 = tpu.matmul %0, %1, %cst {dimension_numbers = #tpu.dot_dimension_numbers<[1], [0], [0], [1], [0, 0, 1, 1], [], []>} : vector<8x768xbf16>, vector<768x128xbf16>, vector<8x128xf32> -> vector<8x128xf32>
    %c0_3 = arith.constant 0 : index
    %c0_4 = arith.constant 0 : index
    %3 = vector.load %arg3[%c0_3, %c0_4] : memref<1x128xf32, #tpu.memory_space<vmem>>, vector<1x128xf32>
    %4 = vector.broadcast %3 : vector<1x128xf32> to vector<8x128xf32>
    %5 = arith.addf %2, %4 : vector<8x128xf32>
    %cst_5 = arith.constant 0.000000e+00 : f32
    %6 = vector.broadcast %cst_5 : f32 to vector<8x128xf32>
    %7 = arith.maximumf %5, %6 : vector<8x128xf32>
    %8 = arith.truncf %7 : vector<8x128xf32> to vector<8x128xbf16>
    %c0_6 = arith.constant 0 : index
    %c0_7 = arith.constant 0 : index
    %c0_8 = arith.constant 0 : index
    %9 = vector.load %arg4[%c0_6, %c0_7, %c0_8] : memref<2x128x128xbf16, #tpu.memory_space<vmem>>, vector<1x128x128xbf16>
    %10 = vector.shape_cast %9 : vector<1x128x128xbf16> to vector<128x128xbf16>
    %cst_9 = arith.constant dense<0.000000e+00> : vector<8x128xf32>
    %11 = tpu.matmul %8, %10, %cst_9 {dimension_numbers = #tpu.dot_dimension_numbers<[1], [0], [0], [1], [0, 0, 1, 1], [], []>} : vector<8x128xbf16>, vector<128x128xbf16>, vector<8x128xf32> -> vector<8x128xf32>
    %c0_10 = arith.constant 0 : index
    %c0_11 = arith.constant 0 : index
    %c0_12 = arith.constant 0 : index
    %12 = vector.load %arg5[%c0_10, %c0_11, %c0_12] : memref<2x1x128xf32, #tpu.memory_space<vmem>>, vector<1x1x128xf32>
    %13 = vector.shape_cast %12 : vector<1x1x128xf32> to vector<1x128xf32>
    %14 = vector.broadcast %13 : vector<1x128xf32> to vector<8x128xf32>
    %15 = arith.addf %11, %14 : vector<8x128xf32>
    %cst_13 = arith.constant 0.000000e+00 : f32
    %16 = vector.broadcast %cst_13 : f32 to vector<8x128xf32>
    %17 = arith.maximumf %15, %16 : vector<8x128xf32>
    %18 = arith.addf %17, %7 : vector<8x128xf32>
    %19 = arith.truncf %18 : vector<8x128xf32> to vector<8x128xbf16>
    %c1 = arith.constant 1 : index
    %c0_14 = arith.constant 0 : index
    %c0_15 = arith.constant 0 : index
    %20 = vector.load %arg4[%c1, %c0_14, %c0_15] : memref<2x128x128xbf16, #tpu.memory_space<vmem>>, vector<1x128x128xbf16>
    %21 = vector.shape_cast %20 : vector<1x128x128xbf16> to vector<128x128xbf16>
    %cst_16 = arith.constant dense<0.000000e+00> : vector<8x128xf32>
    %22 = tpu.matmul %19, %21, %cst_16 {dimension_numbers = #tpu.dot_dimension_numbers<[1], [0], [0], [1], [0, 0, 1, 1], [], []>} : vector<8x128xbf16>, vector<128x128xbf16>, vector<8x128xf32> -> vector<8x128xf32>
    %c1_17 = arith.constant 1 : index
    %c0_18 = arith.constant 0 : index
    %c0_19 = arith.constant 0 : index
    %23 = vector.load %arg5[%c1_17, %c0_18, %c0_19] : memref<2x1x128xf32, #tpu.memory_space<vmem>>, vector<1x1x128xf32>
    %24 = vector.shape_cast %23 : vector<1x1x128xf32> to vector<1x128xf32>
    %25 = vector.broadcast %24 : vector<1x128xf32> to vector<8x128xf32>
    %26 = arith.addf %22, %25 : vector<8x128xf32>
    %cst_20 = arith.constant 0.000000e+00 : f32
    %27 = vector.broadcast %cst_20 : f32 to vector<8x128xf32>
    %28 = arith.maximumf %26, %27 : vector<8x128xf32>
    %29 = arith.addf %28, %18 : vector<8x128xf32>
    %30 = arith.truncf %29 : vector<8x128xf32> to vector<8x128xbf16>
    %c0_21 = arith.constant 0 : index
    %c0_22 = arith.constant 0 : index
    %31 = vector.load %arg6[%c0_21, %c0_22] : memref<128x128xbf16, #tpu.memory_space<vmem>>, vector<128x128xbf16>
    %cst_23 = arith.constant dense<0.000000e+00> : vector<8x128xf32>
    %32 = tpu.matmul %30, %31, %cst_23 {dimension_numbers = #tpu.dot_dimension_numbers<[1], [0], [0], [1], [0, 0, 1, 1], [], []>} : vector<8x128xbf16>, vector<128x128xbf16>, vector<8x128xf32> -> vector<8x128xf32>
    %c0_24 = arith.constant 0 : index
    %c0_25 = arith.constant 0 : index
    %33 = vector.load %arg7[%c0_24, %c0_25] : memref<1x128xf32, #tpu.memory_space<vmem>>, vector<1x128xf32>
    %34 = vector.broadcast %33 : vector<1x128xf32> to vector<8x128xf32>
    %35 = arith.addf %32, %34 : vector<8x128xf32>
    %c0_26 = arith.constant 0 : index
    %c0_27 = arith.constant 0 : index
    %36 = vector.load %arg8[%c0_26, %c0_27] : memref<8x128xf32, #tpu.memory_space<vmem>>, vector<8x128xf32>
    tpu.vector_store %arg8[%c0_26, %c0_27], %35 {strides = array<i32>} : memref<8x128xf32, #tpu.memory_space<vmem>>, vector<8x128xf32>,
    return
  }
  func.func @transform_0(%arg0: i32) -> (i32, i32) {
    %c0_i32 = arith.constant 0 : i32
    %c0_i32_0 = arith.constant 0 : i32
    return %arg0, %c0_i32 : i32, i32
  }
  func.func @transform_1(%arg0: i32) -> (i32, i32) {
    %c0_i32 = arith.constant 0 : i32
    %c0_i32_0 = arith.constant 0 : i32
    %c0_i32_1 = arith.constant 0 : i32
    return %c0_i32, %c0_i32_0 : i32, i32
  }
  func.func @transform_2(%arg0: i32) -> (i32, i32) {
    %c0_i32 = arith.constant 0 : i32
    %c0_i32_0 = arith.constant 0 : i32
    %c0_i32_1 = arith.constant 0 : i32
    return %c0_i32, %c0_i32_0 : i32, i32
  }
  func.func @transform_3(%arg0: i32) -> (i32, i32, i32) {
    %c0_i32 = arith.constant 0 : i32
    %c0_i32_0 = arith.constant 0 : i32
    %c0_i32_1 = arith.constant 0 : i32
    %c0_i32_2 = arith.constant 0 : i32
    return %c0_i32, %c0_i32_0, %c0_i32_1 : i32, i32, i32
  }
  func.func @transform_4(%arg0: i32) -> (i32, i32, i32) {
    %c0_i32 = arith.constant 0 : i32
    %c0_i32_0 = arith.constant 0 : i32
    %c0_i32_1 = arith.constant 0 : i32
    %c0_i32_2 = arith.constant 0 : i32
    return %c0_i32, %c0_i32_0, %c0_i32_1 : i32, i32, i32
  }
  func.func @transform_5(%arg0: i32) -> (i32, i32) {
    %c0_i32 = arith.constant 0 : i32
    %c0_i32_0 = arith.constant 0 : i32
    %c0_i32_1 = arith.constant 0 : i32
    return %c0_i32, %c0_i32_0 : i32, i32
  }
  func.func @transform_6(%arg0: i32) -> (i32, i32) {
    %c0_i32 = arith.constant 0 : i32
    %c0_i32_0 = arith.constant 0 : i32
    %c0_i32_1 = arith.constant 0 : i32
    return %c0_i32, %c0_i32_0 : i32, i32
  }
  func.func @transform_7(%arg0: i32) -> (i32, i32) {
    %c0_i32 = arith.constant 0 : i32
    %c0_i32_0 = arith.constant 0 : i32
    return %arg0, %c0_i32 : i32, i32
  }
}

</mosaic_0001>

<llo_original>
// kernel: tpu_custom_call.1
$region0: #{tpu_custom_call.1}
  #allocation0 [shape = 'u32[]', space=smem, size = 0x4, offset = 0x4, fixed_abs, tag = 'smem constant byte address 0x4 - core index']
  #allocation1 [shape = 'u32[144,128]{1,0:T(1,128)}', space=vmem, size = 0x12000, scoped, tag = 'internal scratch']
  %s0 = inlined_call_operand.hbm [shape: bf16[8,768], index: 0, kind: input, shape index: {}]
  %s1 = inlined_call_operand.hbm [shape: bf16[768,128], index: 1, kind: input, shape index: {}]
  %s2 = inlined_call_operand.vmem [shape: f32[1,128], index: 2, kind: input, shape index: {}]
  %s3 = inlined_call_operand.hbm [shape: bf16[2,128,128], index: 3, kind: input, shape index: {}]
  %s4 = inlined_call_operand.vmem [shape: f32[2,1,128], index: 4, kind: input, shape index: {}]
  %s5 = inlined_call_operand.hbm [shape: bf16[128,128], index: 5, kind: input, shape index: {}]
  %s6 = inlined_call_operand.vmem [shape: f32[1,128], index: 6, kind: input, shape index: {}]
  %s7 = inlined_call_operand.hbm [shape: f32[8,128], index: 7, kind: output, shape index: {}]
  %s8 = sld [smem:[#allocation0]]
  $region54: #{tpu_custom_call.1} parent=0
    _
  %s10 = ssub.s32 1, %s8
  %s11 = scalar_select 0, %s10, %s8
  $region1: #{tpu_custom_call.1} parent=0
    #allocation2 [shape = 'u8[12288]{0}', space=vmem, size = 0x3000, scoped, tag = 'input window, operand 0, single buffered']
    #allocation3 [shape = 's32[1]{0}', space=sflag, size = 0x4, scoped, tag = 'scoped memory for tpu_custom_call.1']
    #allocation4 [shape = 's32[1]{0}', space=sflag, size = 0x4, scoped, tag = 'scoped memory for tpu_custom_call.1']
    #allocation5 [shape = 'u8[196608]{0}', space=vmem, size = 0x30000, scoped, tag = 'input window, operand 1, single buffered']
    #allocation6 [shape = 's32[1]{0}', space=sflag, size = 0x4, scoped, tag = 'scoped memory for tpu_custom_call.1']
    #allocation7 [shape = 'u8[65536]{0}', space=vmem, size = 0x10000, scoped, tag = 'input window, operand 3, single buffered']
    #allocation8 [shape = 'u8[32768]{0}', space=vmem, size = 0x8000, scoped, tag = 'input window, operand 5, single buffered']
    #allocation9 [shape = 's32[1]{0}', space=sflag, size = 0x4, scoped, tag = 'scoped memory for tpu_custom_call.1']
    #allocation10 [shape = 'u8[4096]{0}', space=vmem, size = 0x1000, scoped, tag = 'output window, operand 0, single buffered']
    %12 = vsyncpa [#allocation3], 0
    %13 = vsyncpa [#allocation6], 0
    %14 = vsyncpa [#allocation9], 0
    %15 = vsyncpa [#allocation4], 0
    // Predicated region
    $region2: #{tpu_custom_call.1} parent=1 // pred_check
      _
    $region3: #{tpu_custom_call.1} parent=1 // pred_check_branch
      %17 = sbr.rel (0) target = $region5
    $region4: #{tpu_custom_call.1} parent=1 // pred_region
      %s19 = ssub.s32 384, 384
      %20 = vsyncadd [#allocation3], %s19
      %s22 = sshll.u32 [#allocation2], 4
      %s23 = int_to_ptr.vmem [resolvable:$true] %s22
      %25 = dma.hbm_to_vmem [thread:$0]  %s0, 384, %s23, [#allocation3]
    $region5: #{tpu_custom_call.1} parent=1 // pred_fallthru
      _
    // Predicated region
    $region6: #{tpu_custom_call.1} parent=1 // pred_check
      _
    $region7: #{tpu_custom_call.1} parent=1 // pred_check_branch
      %27 = sbr.rel (0) target = $region9
    $region8: #{tpu_custom_call.1} parent=1 // pred_region
      %s29 = ssub.s32 6144, 6144
      %30 = vsyncadd [#allocation6], %s29
      %s31 = sshll.u32 [#allocation5], 4
      %s32 = int_to_ptr.vmem [resolvable:$true] %s31
      %37 = dma.hbm_to_vmem [thread:$0]  %s1, 6144, %s32, [#allocation6], 64, 64, 4
    $region9: #{tpu_custom_call.1} parent=1 // pred_fallthru
      _
    // Predicated region
    $region10: #{tpu_custom_call.1} parent=1 // pred_check
      _
    $region11: #{tpu_custom_call.1} parent=1 // pred_check_branch
      %39 = sbr.rel (0) target = $region13
    $region12: #{tpu_custom_call.1} parent=1 // pred_region
      _
    $region13: #{tpu_custom_call.1} parent=1 // pred_fallthru
      _
    // Predicated region
    $region14: #{tpu_custom_call.1} parent=1 // pred_check
      _
    $region15: #{tpu_custom_call.1} parent=1 // pred_check_branch
      %41 = sbr.rel (0) target = $region17
    $region16: #{tpu_custom_call.1} parent=1 // pred_region
      %s43 = ssub.s32 2048, 2048
      %44 = vsyncadd [#allocation6], %s43
      %s45 = sshll.u32 [#allocation7], 4
      %s46 = int_to_ptr.vmem [resolvable:$true] %s45
      %51 = dma.hbm_to_vmem [thread:$0]  %s3, 2048, %s46, [#allocation6], 64, 64, 4
    $region17: #{tpu_custom_call.1} parent=1 // pred_fallthru
      _
    // Predicated region
    $region18: #{tpu_custom_call.1} parent=1 // pred_check
      _
    $region19: #{tpu_custom_call.1} parent=1 // pred_check_branch
      %53 = sbr.rel (0) target = $region21
    $region20: #{tpu_custom_call.1} parent=1 // pred_region
      _
    $region21: #{tpu_custom_call.1} parent=1 // pred_fallthru
      _
    // Predicated region
    $region22: #{tpu_custom_call.1} parent=1 // pred_check
      _
    $region23: #{tpu_custom_call.1} parent=1 // pred_check_branch
      %55 = sbr.rel (0) target = $region25
    $region24: #{tpu_custom_call.1} parent=1 // pred_region
      %s57 = ssub.s32 1024, 1024
      %58 = vsyncadd [#allocation9], %s57
      %s59 = sshll.u32 [#allocation8], 4
      %s60 = int_to_ptr.vmem [resolvable:$true] %s59
      %65 = dma.hbm_to_vmem [thread:$0]  %s5, 1024, %s60, [#allocation9], 64, 64, 4
    $region25: #{tpu_custom_call.1} parent=1 // pred_fallthru
      _
    // Predicated region
    $region26: #{tpu_custom_call.1} parent=1 // pred_check
      _
    $region27: #{tpu_custom_call.1} parent=1 // pred_check_branch
      %67 = sbr.rel (0) target = $region29
    $region28: #{tpu_custom_call.1} parent=1 // pred_region
      _
    $region29: #{tpu_custom_call.1} parent=1 // pred_fallthru
      _
    // Predicated region
    $region30: #{tpu_custom_call.1} parent=1 // pred_check
      _
    $region31: #{tpu_custom_call.1} parent=1 // pred_check_branch
      %69 = sbr.rel (0) target = $region33
    $region32: #{tpu_custom_call.1} parent=1 // pred_region
      %70 = dma.done [#allocation3], 384
    $region33: #{tpu_custom_call.1} parent=1 // pred_fallthru
      _
    // Predicated region
    $region34: #{tpu_custom_call.1} parent=1 // pred_check
      _
    $region35: #{tpu_custom_call.1} parent=1 // pred_check_branch
      %72 = sbr.rel (0) target = $region37
    $region36: #{tpu_custom_call.1} parent=1 // pred_region
      %73 = dma.done [#allocation6], 6144
    $region37: #{tpu_custom_call.1} parent=1 // pred_fallthru
      _
    // Predicated region
    $region38: #{tpu_custom_call.1} parent=1 // pred_check
      _
    $region39: #{tpu_custom_call.1} parent=1 // pred_check_branch
      %75 = sbr.rel (0) target = $region41
    $region40: #{tpu_custom_call.1} parent=1 // pred_region
      %76 = dma.done [#allocation6], 2048
    $region41: #{tpu_custom_call.1} parent=1 // pred_fallthru
      _
    // Predicated region
    $region42: #{tpu_custom_call.1} parent=1 // pred_check
      _
    $region43: #{tpu_custom_call.1} parent=1 // pred_check_branch
      %78 = sbr.rel (0) target = $region45
    $region44: #{tpu_custom_call.1} parent=1 // pred_region
      %79 = dma.done [#allocation9], 1024
    $region45: #{tpu_custom_call.1} parent=1 // pred_fallthru
      _
    %v81 = vld [vmem:[#allocation2] sm:$0xff]
    %v82 = vld [vmem:[#allocation2 + $0x8] sm:$0xff]
    %v83 = vld [vmem:[#allocation2 + $0x10] sm:$0xff]
    %v84 = vld [vmem:[#allocation5] sm:$0xf]
    %v85 = vld [vmem:[#allocation5 + $0x4] sm:$0xf]
    %v86 = vld [vmem:[#allocation5 + $0x8] sm:$0xf]
    %v87 = vld [vmem:[#allocation5 + $0xc] sm:$0xf]
    %v88 = vld [vmem:[#allocation5 + $0x10] sm:$0xf]
    %v89 = vld [vmem:[#allocation5 + $0x14] sm:$0xf]
    %v90 = vld [vmem:[#allocation5 + $0x18] sm:$0xf]
    %v91 = vld [vmem:[#allocation5 + $0x1c] sm:$0xf]
    %v92 = vld [vmem:[#allocation5 + $0x20] sm:$0xf]
    %v93 = vld [vmem:[#allocation5 + $0x24] sm:$0xf]
    %v94 = vld [vmem:[#allocation5 + $0x28] sm:$0xf]
    %v95 = vld [vmem:[#allocation5 + $0x2c] sm:$0xf]
    %v96 = vld [vmem:[#allocation5 + $0x30] sm:$0xf]
    %v97 = vld [vmem:[#allocation5 + $0x34] sm:$0xf]
    %v98 = vld [vmem:[#allocation5 + $0x38] sm:$0xf]
    %v99 = vld [vmem:[#allocation5 + $0x3c] sm:$0xf]
    %v100 = vld [vmem:[#allocation5 + $0x40] sm:$0xf]
    %v101 = vld [vmem:[#allocation5 + $0x44] sm:$0xf]
    %v102 = vld [vmem:[#allocation5 + $0x48] sm:$0xf]
    %v103 = vld [vmem:[#allocation5 + $0x4c] sm:$0xf]
    %v104 = vld [vmem:[#allocation5 + $0x50] sm:$0xf]
    %v105 = vld [vmem:[#allocation5 + $0x54] sm:$0xf]
    %v106 = vld [vmem:[#allocation5 + $0x58] sm:$0xf]
    %v107 = vld [vmem:[#allocation5 + $0x5c] sm:$0xf]
    %v108 = vld [vmem:[#allocation5 + $0x60] sm:$0xf]
    %v109 = vld [vmem:[#allocation5 + $0x64] sm:$0xf]
    %v110 = vld [vmem:[#allocation5 + $0x68] sm:$0xf]
    %v111 = vld [vmem:[#allocation5 + $0x6c] sm:$0xf]
    %v112 = vld [vmem:[#allocation5 + $0x70] sm:$0xf]
    %v113 = vld [vmem:[#allocation5 + $0x74] sm:$0xf]
    %v114 = vld [vmem:[#allocation5 + $0x78] sm:$0xf]
    %v115 = vld [vmem:[#allocation5 + $0x7c] sm:$0xf]
    %v116 = vld [vmem:[#allocation5 + $0x80] sm:$0xf]
    %v117 = vld [vmem:[#allocation5 + $0x84] sm:$0xf]
    %v118 = vld [vmem:[#allocation5 + $0x88] sm:$0xf]
    %v119 = vld [vmem:[#allocation5 + $0x8c] sm:$0xf]
    %v120 = vld [vmem:[#allocation5 + $0x90] sm:$0xf]
    %v121 = vld [vmem:[#allocation5 + $0x94] sm:$0xf]
    %v122 = vld [vmem:[#allocation5 + $0x98] sm:$0xf]
    %v123 = vld [vmem:[#allocation5 + $0x9c] sm:$0xf]
    %v124 = vld [vmem:[#allocation5 + $0xa0] sm:$0xf]
    %v125 = vld [vmem:[#allocation5 + $0xa4] sm:$0xf]
    %v126 = vld [vmem:[#allocation5 + $0xa8] sm:$0xf]
    %v127 = vld [vmem:[#allocation5 + $0xac] sm:$0xf]
    %v128 = vld [vmem:[#allocation5 + $0xb0] sm:$0xf]
    %v129 = vld [vmem:[#allocation5 + $0xb4] sm:$0xf]
    %v130 = vld [vmem:[#allocation5 + $0xb8] sm:$0xf]
    %v131 = vld [vmem:[#allocation5 + $0xbc] sm:$0xf]
    %v132 = vld [vmem:[#allocation5 + $0xc0] sm:$0xf]
    %v133 = vld [vmem:[#allocation5 + $0xc4] sm:$0xf]
    %v134 = vld [vmem:[#allocation5 + $0xc8] sm:$0xf]
    %v135 = vld [vmem:[#allocation5 + $0xcc] sm:$0xf]
    %v136 = vld [vmem:[#allocation5 + $0xd0] sm:$0xf]
    %v137 = vld [vmem:[#allocation5 + $0xd4] sm:$0xf]
    %v138 = vld [vmem:[#allocation5 + $0xd8] sm:$0xf]
    %v139 = vld [vmem:[#allocation5 + $0xdc] sm:$0xf]
    %v140 = vld [vmem:[#allocation5 + $0xe0] sm:$0xf]
    %v141 = vld [vmem:[#allocation5 + $0xe4] sm:$0xf]
    %v142 = vld [vmem:[#allocation5 + $0xe8] sm:$0xf]
    %v143 = vld [vmem:[#allocation5 + $0xec] sm:$0xf]
    %v144 = vld [vmem:[#allocation5 + $0xf0] sm:$0xf]
    %v145 = vld [vmem:[#allocation5 + $0xf4] sm:$0xf]
    %v146 = vld [vmem:[#allocation5 + $0xf8] sm:$0xf]
    %v147 = vld [vmem:[#allocation5 + $0xfc] sm:$0xf]
    %v148 = vld [vmem:[#allocation5 + $0x100] sm:$0xf]
    %v149 = vld [vmem:[#allocation5 + $0x104] sm:$0xf]
    %v150 = vld [vmem:[#allocation5 + $0x108] sm:$0xf]
    %v151 = vld [vmem:[#allocation5 + $0x10c] sm:$0xf]
    %v152 = vld [vmem:[#allocation5 + $0x110] sm:$0xf]
    %v153 = vld [vmem:[#allocation5 + $0x114] sm:$0xf]
    %v154 = vld [vmem:[#allocation5 + $0x118] sm:$0xf]
    %v155 = vld [vmem:[#allocation5 + $0x11c] sm:$0xf]
    %v156 = vld [vmem:[#allocation5 + $0x120] sm:$0xf]
    %v157 = vld [vmem:[#allocation5 + $0x124] sm:$0xf]
    %v158 = vld [vmem:[#allocation5 + $0x128] sm:$0xf]
    %v159 = vld [vmem:[#allocation5 + $0x12c] sm:$0xf]
    %v160 = vld [vmem:[#allocation5 + $0x130] sm:$0xf]
    %v161 = vld [vmem:[#allocation5 + $0x134] sm:$0xf]
    %v162 = vld [vmem:[#allocation5 + $0x138] sm:$0xf]
    %v163 = vld [vmem:[#allocation5 + $0x13c] sm:$0xf]
    %v164 = vld [vmem:[#allocation5 + $0x140] sm:$0xf]
    %v165 = vld [vmem:[#allocation5 + $0x144] sm:$0xf]
    %v166 = vld [vmem:[#allocation5 + $0x148] sm:$0xf]
    %v167 = vld [vmem:[#allocation5 + $0x14c] sm:$0xf]
    %v168 = vld [vmem:[#allocation5 + $0x150] sm:$0xf]
    %v169 = vld [vmem:[#allocation5 + $0x154] sm:$0xf]
    %v170 = vld [vmem:[#allocation5 + $0x158] sm:$0xf]
    %v171 = vld [vmem:[#allocation5 + $0x15c] sm:$0xf]
    %v172 = vld [vmem:[#allocation5 + $0x160] sm:$0xf]
    %v173 = vld [vmem:[#allocation5 + $0x164] sm:$0xf]
    %v174 = vld [vmem:[#allocation5 + $0x168] sm:$0xf]
    %v175 = vld [vmem:[#allocation5 + $0x16c] sm:$0xf]
    %v176 = vld [vmem:[#allocation5 + $0x170] sm:$0xf]
    %v177 = vld [vmem:[#allocation5 + $0x174] sm:$0xf]
    %v178 = vld [vmem:[#allocation5 + $0x178] sm:$0xf]
    %v179 = vld [vmem:[#allocation5 + $0x17c] sm:$0xf]
    %v180 = vld [vmem:[%s2] sm:$0x1]
    %v182 = vlaneseq
    %v183 = vshrl.u32 %v182, 7
    %v184 = vsub.s32 0, %v183
    %v185 = vrot.slane %v180, %v184
    %v190 = vunpack.c.l.b16 %v81
    %v191 = vunpack.c.h.b16 %v81
    %v192 = vunpack.c.l.b16 %v82
    %v193 = vunpack.c.h.b16 %v82
    %v194 = vunpack.c.l.b16 %v83
    %v195 = vunpack.c.h.b16 %v83
    %v196 = vpack.c.b16 %v190, %v190
    %v197 = vpack.c.b16 %v191, %v191
    %v198 = vpack.c.b16 %v192, %v192
    %v199 = vpack.c.b16 %v193, %v193
    %v200 = vpack.c.b16 %v194, %v194
    %v201 = vpack.c.b16 %v195, %v195
    %v304 = vunpack.c.l.b16 %v84
    %v305 = vunpack.c.l.b16 %v85
    %v306 = vunpack.c.l.b16 %v86
    %v307 = vunpack.c.l.b16 %v87
    %v308 = vunpack.c.l.b16 %v88
    %v309 = vunpack.c.l.b16 %v89
    %v310 = vunpack.c.l.b16 %v90
    %v311 = vunpack.c.l.b16 %v91
    %v312 = vunpack.c.l.b16 %v92
    %v313 = vunpack.c.l.b16 %v93
    %v314 = vunpack.c.l.b16 %v94
    %v315 = vunpack.c.l.b16 %v95
    %v316 = vunpack.c.l.b16 %v96
    %v317 = vunpack.c.l.b16 %v97
    %v318 = vunpack.c.l.b16 %v98
    %v319 = vunpack.c.l.b16 %v99
    %v320 = vunpack.c.l.b16 %v100
    %v321 = vunpack.c.l.b16 %v101
    %v322 = vunpack.c.l.b16 %v102
    %v323 = vunpack.c.l.b16 %v103
    %v324 = vunpack.c.l.b16 %v104
    %v325 = vunpack.c.l.b16 %v105
    %v326 = vunpack.c.l.b16 %v106
    %v327 = vunpack.c.l.b16 %v107
    %v328 = vunpack.c.l.b16 %v108
    %v329 = vunpack.c.l.b16 %v109
    %v330 = vunpack.c.l.b16 %v110
    %v331 = vunpack.c.l.b16 %v111
    %v332 = vunpack.c.l.b16 %v112
    %v333 = vunpack.c.l.b16 %v113
    %v334 = vunpack.c.l.b16 %v114
    %v335 = vunpack.c.l.b16 %v115
    %v336 = vunpack.c.l.b16 %v116
    %v337 = vunpack.c.l.b16 %v117
    %v338 = vunpack.c.l.b16 %v118
    %v339 = vunpack.c.l.b16 %v119
    %v340 = vunpack.c.l.b16 %v120
    %v341 = vunpack.c.l.b16 %v121
    %v342 = vunpack.c.l.b16 %v122
    %v343 = vunpack.c.l.b16 %v123
    %v344 = vunpack.c.l.b16 %v124
    %v345 = vunpack.c.l.b16 %v125
    %v346 = vunpack.c.l.b16 %v126
    %v347 = vunpack.c.l.b16 %v127
    %v348 = vunpack.c.l.b16 %v128
    %v349 = vunpack.c.l.b16 %v129
    %v350 = vunpack.c.l.b16 %v130
    %v351 = vunpack.c.l.b16 %v131
    %v352 = vunpack.c.l.b16 %v132
    %v353 = vunpack.c.l.b16 %v133
    %v354 = vunpack.c.l.b16 %v134
    %v355 = vunpack.c.l.b16 %v135
    %v356 = vunpack.c.l.b16 %v136
    %v357 = vunpack.c.l.b16 %v137
    %v358 = vunpack.c.l.b16 %v138
    %v359 = vunpack.c.l.b16 %v139
    %v360 = vunpack.c.l.b16 %v140
    %v361 = vunpack.c.l.b16 %v141
    %v362 = vunpack.c.l.b16 %v142
    %v363 = vunpack.c.l.b16 %v143
    %v364 = vunpack.c.l.b16 %v144
    %v365 = vunpack.c.l.b16 %v145
    %v366 = vunpack.c.l.b16 %v146
    %v367 = vunpack.c.l.b16 %v147
    %v368 = vunpack.c.l.b16 %v148
    %v369 = vunpack.c.l.b16 %v149
    %v370 = vunpack.c.l.b16 %v150
    %v371 = vunpack.c.l.b16 %v151
    %v372 = vunpack.c.l.b16 %v152
    %v373 = vunpack.c.l.b16 %v153
    %v374 = vunpack.c.l.b16 %v154
    %v375 = vunpack.c.l.b16 %v155
    %v376 = vunpack.c.l.b16 %v156
    %v377 = vunpack.c.l.b16 %v157
    %v378 = vunpack.c.l.b16 %v158
    %v379 = vunpack.c.l.b16 %v159
    %v380 = vunpack.c.l.b16 %v160
    %v381 = vunpack.c.l.b16 %v161
    %v382 = vunpack.c.l.b16 %v162
    %v383 = vunpack.c.l.b16 %v163
    %v384 = vunpack.c.l.b16 %v164
    %v385 = vunpack.c.l.b16 %v165
    %v386 = vunpack.c.l.b16 %v166
    %v387 = vunpack.c.l.b16 %v167
    %v388 = vunpack.c.l.b16 %v168
    %v389 = vunpack.c.l.b16 %v169
    %v390 = vunpack.c.l.b16 %v170
    %v391 = vunpack.c.l.b16 %v171
    %v392 = vunpack.c.l.b16 %v172
    %v393 = vunpack.c.l.b16 %v173
    %v394 = vunpack.c.l.b16 %v174
    %v395 = vunpack.c.l.b16 %v175
    %v396 = vunpack.c.l.b16 %v176
    %v397 = vunpack.c.l.b16 %v177
    %v398 = vunpack.c.l.b16 %v178
    %v399 = vunpack.c.l.b16 %v179
    %v400 = vpack.c.b16 %v305, %v304
    %v401 = vpack.c.b16 %v307, %v306
    %v402 = vpack.c.b16 %v309, %v308
    %v403 = vpack.c.b16 %v311, %v310
    %v404 = vpack.c.b16 %v313, %v312
    %v405 = vpack.c.b16 %v315, %v314
    %v406 = vpack.c.b16 %v317, %v316
    %v407 = vpack.c.b16 %v319, %v318
    %v408 = vpack.c.b16 %v321, %v320
    %v409 = vpack.c.b16 %v323, %v322
    %v410 = vpack.c.b16 %v325, %v324
    %v411 = vpack.c.b16 %v327, %v326
    %v412 = vpack.c.b16 %v329, %v328
    %v413 = vpack.c.b16 %v331, %v330
    %v414 = vpack.c.b16 %v333, %v332
    %v415 = vpack.c.b16 %v335, %v334
    %v416 = vpack.c.b16 %v337, %v336
    %v417 = vpack.c.b16 %v339, %v338
    %v418 = vpack.c.b16 %v341, %v340
    %v419 = vpack.c.b16 %v343, %v342
    %v420 = vpack.c.b16 %v345, %v344
    %v421 = vpack.c.b16 %v347, %v346
    %v422 = vpack.c.b16 %v349, %v348
    %v423 = vpack.c.b16 %v351, %v350
    %v424 = vpack.c.b16 %v353, %v352
    %v425 = vpack.c.b16 %v355, %v354
    %v426 = vpack.c.b16 %v357, %v356
    %v427 = vpack.c.b16 %v359, %v358
    %v428 = vpack.c.b16 %v361, %v360
    %v429 = vpack.c.b16 %v363, %v362
    %v430 = vpack.c.b16 %v365, %v364
    %v431 = vpack.c.b16 %v367, %v366
    %v432 = vpack.c.b16 %v369, %v368
    %v433 = vpack.c.b16 %v371, %v370
    %v434 = vpack.c.b16 %v373, %v372
    %v435 = vpack.c.b16 %v375, %v374
    %v436 = vpack.c.b16 %v377, %v376
    %v437 = vpack.c.b16 %v379, %v378
    %v438 = vpack.c.b16 %v381, %v380
    %v439 = vpack.c.b16 %v383, %v382
    %v440 = vpack.c.b16 %v385, %v384
    %v441 = vpack.c.b16 %v387, %v386
    %v442 = vpack.c.b16 %v389, %v388
    %v443 = vpack.c.b16 %v391, %v390
    %v444 = vpack.c.b16 %v393, %v392
    %v445 = vpack.c.b16 %v395, %v394
    %v446 = vpack.c.b16 %v397, %v396
    %v447 = vpack.c.b16 %v399, %v398
    %496 = vmatprep.subr.bf16.mxu0 0
    %497 = vmatpush1.bf16.msra.mxu0 %v400
    %498 = vmatprep.subr.bf16.mxu0 0
    %499 = vmatpush1.bf16.msra.mxu0 %v401
    %500 = vmatprep.subr.bf16.mxu0 0
    %501 = vmatpush1.bf16.msra.mxu0 %v402
    %502 = vmatprep.subr.bf16.mxu0 0
    %503 = vmatpush1.bf16.msra.mxu0 %v403
    %504 = vmatprep.subr.bf16.mxu0 0
    %505 = vmatpush1.bf16.msra.mxu0 %v404
    %506 = vmatprep.subr.bf16.mxu0 0
    %507 = vmatpush1.bf16.msra.mxu0 %v405
    %508 = vmatprep.subr.bf16.mxu0 0
    %509 = vmatpush1.bf16.msra.mxu0 %v406
    %510 = vmatprep.subr.bf16.mxu0 0
    %511 = vmatpush1.bf16.msra.mxu0 %v407
    %512 = vmatprep.subr.bf16.mxu0 0
    %513 = vmatpush1.bf16.msra.mxu0 %v408
    %514 = vmatprep.subr.bf16.mxu0 0
    %515 = vmatpush1.bf16.msra.mxu0 %v409
    %516 = vmatprep.subr.bf16.mxu0 0
    %517 = vmatpush1.bf16.msra.mxu0 %v410
    %518 = vmatprep.subr.bf16.mxu0 0
    %519 = vmatpush1.bf16.msra.mxu0 %v411
    %520 = vmatprep.subr.bf16.mxu0 0
    %521 = vmatpush1.bf16.msra.mxu0 %v412
    %522 = vmatprep.subr.bf16.mxu0 0
    %523 = vmatpush1.bf16.msra.mxu0 %v413
    %524 = vmatprep.subr.bf16.mxu0 0
    %525 = vmatpush1.bf16.msra.mxu0 %v414
    %526 = vmatprep.subr.bf16.mxu0 0
    %527 = vmatpush1.bf16.msra.mxu0 %v415
    %528 = vmatprep.mubr.bf16.mxu0 %v197
    %529 = vmatmul.mubr.bf16.gmra.mrb[0].mxu0 %v196
    %v530 = vpop.f32.mrb[0].mxu0
    %v531 = vadd.f32 %v185, %v530
    %v532 = vpop.f32.mrb[0].mxu0
    %v533 = vpop.f32.mrb[0].mxu0
    %v534 = vpop.f32.mrb[0].mxu0
    %535 = vdwg.mxu0
    %536 = vmatprep.subr.bf16.mxu0 0
    %537 = vmatpush1.bf16.msra.mxu0 %v416
    %538 = vmatprep.subr.bf16.mxu0 0
    %539 = vmatpush1.bf16.msra.mxu0 %v417
    %540 = vmatprep.subr.bf16.mxu0 0
    %541 = vmatpush1.bf16.msra.mxu0 %v418
    %542 = vmatprep.subr.bf16.mxu0 0
    %543 = vmatpush1.bf16.msra.mxu0 %v419
    %544 = vmatprep.subr.bf16.mxu0 0
    %545 = vmatpush1.bf16.msra.mxu0 %v420
    %546 = vmatprep.subr.bf16.mxu0 0
    %547 = vmatpush1.bf16.msra.mxu0 %v421
    %548 = vmatprep.subr.bf16.mxu0 0
    %549 = vmatpush1.bf16.msra.mxu0 %v422
    %550 = vmatprep.subr.bf16.mxu0 0
    %551 = vmatpush1.bf16.msra.mxu0 %v423
    %552 = vmatprep.subr.bf16.mxu0 0
    %553 = vmatpush1.bf16.msra.mxu0 %v424
    %554 = vmatprep.subr.bf16.mxu0 0
    %555 = vmatpush1.bf16.msra.mxu0 %v425
    %556 = vmatprep.subr.bf16.mxu0 0
    %557 = vmatpush1.bf16.msra.mxu0 %v426
    %558 = vmatprep.subr.bf16.mxu0 0
    %559 = vmatpush1.bf16.msra.mxu0 %v427
    %560 = vmatprep.subr.bf16.mxu0 0
    %561 = vmatpush1.bf16.msra.mxu0 %v428
    %562 = vmatprep.subr.bf16.mxu0 0
    %563 = vmatpush1.bf16.msra.mxu0 %v429
    %564 = vmatprep.subr.bf16.mxu0 0
    %565 = vmatpush1.bf16.msra.mxu0 %v430
    %566 = vmatprep.subr.bf16.mxu0 0
    %567 = vmatpush1.bf16.msra.mxu0 %v431
    %568 = vmatprep.mubr.bf16.mxu0 %v199
    %569 = vmatmul.mubr.bf16.gmra.mrb[0].mxu0 %v198
    %v570 = vpop.f32.mrb[0].mxu0
    %v571 = vadd.f32 %v531, %v570
    %v572 = vpop.f32.mrb[0].mxu0
    %v573 = vpop.f32.mrb[0].mxu0
    %v574 = vpop.f32.mrb[0].mxu0
    %575 = vdwg.mxu0
    %576 = vmatprep.subr.bf16.mxu0 0
    %577 = vmatpush1.bf16.msra.mxu0 %v432
    %578 = vmatprep.subr.bf16.mxu0 0
    %579 = vmatpush1.bf16.msra.mxu0 %v433
    %580 = vmatprep.subr.bf16.mxu0 0
    %581 = vmatpush1.bf16.msra.mxu0 %v434
    %582 = vmatprep.subr.bf16.mxu0 0
    %583 = vmatpush1.bf16.msra.mxu0 %v435
    %584 = vmatprep.subr.bf16.mxu0 0
    %585 = vmatpush1.bf16.msra.mxu0 %v436
    %586 = vmatprep.subr.bf16.mxu0 0
    %587 = vmatpush1.bf16.msra.mxu0 %v437
    %588 = vmatprep.subr.bf16.mxu0 0
    %589 = vmatpush1.bf16.msra.mxu0 %v438
    %590 = vmatprep.subr.bf16.mxu0 0
    %591 = vmatpush1.bf16.msra.mxu0 %v439
    %592 = vmatprep.subr.bf16.mxu0 0
    %593 = vmatpush1.bf16.msra.mxu0 %v440
    %594 = vmatprep.subr.bf16.mxu0 0
    %595 = vmatpush1.bf16.msra.mxu0 %v441
    %596 = vmatprep.subr.bf16.mxu0 0
    %597 = vmatpush1.bf16.msra.mxu0 %v442
    %598 = vmatprep.subr.bf16.mxu0 0
    %599 = vmatpush1.bf16.msra.mxu0 %v443
    %600 = vmatprep.subr.bf16.mxu0 0
    %601 = vmatpush1.bf16.msra.mxu0 %v444
    %602 = vmatprep.subr.bf16.mxu0 0
    %603 = vmatpush1.bf16.msra.mxu0 %v445
    %604 = vmatprep.subr.bf16.mxu0 0
    %605 = vmatpush1.bf16.msra.mxu0 %v446
    %606 = vmatprep.subr.bf16.mxu0 0
    %607 = vmatpush1.bf16.msra.mxu0 %v447
    %608 = vmatprep.mubr.bf16.mxu0 %v201
    %609 = vmatmul.mubr.bf16.gmra.mrb[0].mxu0 %v200
    %v610 = vpop.f32.mrb[0].mxu0
    %v611 = vadd.f32 %v571, %v610
    %v612 = vpop.f32.mrb[0].mxu0
    %v613 = vpop.f32.mrb[0].mxu0
    %v614 = vpop.f32.mrb[0].mxu0
    %615 = vdwg.mxu0
    %v616 = vmax.f32 %v611, 0.0
    %v617 = vpack.c.bf16 %v616, %v616
    %v618 = vld [vmem:[#allocation7] sm:$0xf]
    %v619 = vld [vmem:[#allocation7 + $0x4] sm:$0xf]
    %v620 = vld [vmem:[#allocation7 + $0x8] sm:$0xf]
    %v621 = vld [vmem:[#allocation7 + $0xc] sm:$0xf]
    %v622 = vld [vmem:[#allocation7 + $0x10] sm:$0xf]
    %v623 = vld [vmem:[#allocation7 + $0x14] sm:$0xf]
    %v624 = vld [vmem:[#allocation7 + $0x18] sm:$0xf]
    %v625 = vld [vmem:[#allocation7 + $0x1c] sm:$0xf]
    %v626 = vld [vmem:[#allocation7 + $0x20] sm:$0xf]
    %v627 = vld [vmem:[#allocation7 + $0x24] sm:$0xf]
    %v628 = vld [vmem:[#allocation7 + $0x28] sm:$0xf]
    %v629 = vld [vmem:[#allocation7 + $0x2c] sm:$0xf]
    %v630 = vld [vmem:[#allocation7 + $0x30] sm:$0xf]
    %v631 = vld [vmem:[#allocation7 + $0x34] sm:$0xf]
    %v632 = vld [vmem:[#allocation7 + $0x38] sm:$0xf]
    %v633 = vld [vmem:[#allocation7 + $0x3c] sm:$0xf]
    %v634 = vld [vmem:[%s4] sm:$0x1]
    %v636 = vlaneseq
    %v637 = vshrl.u32 %v636, 7
    %v638 = vsub.s32 0, %v637
    %v639 = vrot.slane %v634, %v638
    %v657 = vunpack.c.l.b16 %v618
    %v658 = vunpack.c.l.b16 %v619
    %v659 = vunpack.c.l.b16 %v620
    %v660 = vunpack.c.l.b16 %v621
    %v661 = vunpack.c.l.b16 %v622
    %v662 = vunpack.c.l.b16 %v623
    %v663 = vunpack.c.l.b16 %v624
    %v664 = vunpack.c.l.b16 %v625
    %v665 = vunpack.c.l.b16 %v626
    %v666 = vunpack.c.l.b16 %v627
    %v667 = vunpack.c.l.b16 %v628
    %v668 = vunpack.c.l.b16 %v629
    %v669 = vunpack.c.l.b16 %v630
    %v670 = vunpack.c.l.b16 %v631
    %v671 = vunpack.c.l.b16 %v632
    %v672 = vunpack.c.l.b16 %v633
    %v673 = vpack.c.b16 %v658, %v657
    %v674 = vpack.c.b16 %v660, %v659
    %v675 = vpack.c.b16 %v662, %v661
    %v676 = vpack.c.b16 %v664, %v663
    %v677 = vpack.c.b16 %v666, %v665
    %v678 = vpack.c.b16 %v668, %v667
    %v679 = vpack.c.b16 %v670, %v669
    %v680 = vpack.c.b16 %v672, %v671
    %689 = vmatprep.subr.bf16.mxu0 0
    %690 = vmatpush1.bf16.msra.mxu0 %v673
    %691 = vmatprep.subr.bf16.mxu0 0
    %692 = vmatpush1.bf16.msra.mxu0 %v674
    %693 = vmatprep.subr.bf16.mxu0 0
    %694 = vmatpush1.bf16.msra.mxu0 %v675
    %695 = vmatprep.subr.bf16.mxu0 0
    %696 = vmatpush1.bf16.msra.mxu0 %v676
    %697 = vmatprep.subr.bf16.mxu0 0
    %698 = vmatpush1.bf16.msra.mxu0 %v677
    %699 = vmatprep.subr.bf16.mxu0 0
    %700 = vmatpush1.bf16.msra.mxu0 %v678
    %701 = vmatprep.subr.bf16.mxu0 0
    %702 = vmatpush1.bf16.msra.mxu0 %v679
    %703 = vmatprep.subr.bf16.mxu0 0
    %704 = vmatpush1.bf16.msra.mxu0 %v680
    %705 = vmatprep.subr.bf16.mxu0 0
    %706 = vmatpush1.bf16.msra.mxu0 0
    %707 = vmatprep.subr.bf16.mxu0 0
    %708 = vmatpush1.bf16.msra.mxu0 0
    %709 = vmatprep.subr.bf16.mxu0 0
    %710 = vmatpush1.bf16.msra.mxu0 0
    %711 = vmatprep.subr.bf16.mxu0 0
    %712 = vmatpush1.bf16.msra.mxu0 0
    %713 = vmatprep.subr.bf16.mxu0 0
    %714 = vmatpush1.bf16.msra.mxu0 0
    %715 = vmatprep.subr.bf16.mxu0 0
    %716 = vmatpush1.bf16.msra.mxu0 0
    %717 = vmatprep.subr.bf16.mxu0 0
    %718 = vmatpush1.bf16.msra.mxu0 0
    %719 = vmatprep.subr.bf16.mxu0 0
    %720 = vmatpush1.bf16.msra.mxu0 0
    %721 = vmatprep.mubr.bf16.mxu0 0
    %722 = vmatmul.mubr.bf16.gmra.mrb[0].mxu0 %v617
    %v723 = vpop.f32.mrb[0].mxu0
    %v724 = vadd.f32 %v639, %v723
    %v725 = vpop.f32.mrb[0].mxu0
    %v726 = vpop.f32.mrb[0].mxu0
    %v727 = vpop.f32.mrb[0].mxu0
    %728 = vdwg.mxu0
    %v729 = vmax.f32 %v724, 0.0
    %v730 = vadd.f32 %v729, %v616
    %v731 = vpack.c.bf16 %v730, %v730
    %s732 = scalar_lea.vmem [#allocation7], 64
    %v733 = vld [vmem:[%s732] sm:$0xf]
    %v734 = vld [vmem:[%s732 + $0x4] sm:$0xf]
    %v735 = vld [vmem:[%s732 + $0x8] sm:$0xf]
    %v736 = vld [vmem:[%s732 + $0xc] sm:$0xf]
    %v737 = vld [vmem:[%s732 + $0x10] sm:$0xf]
    %v738 = vld [vmem:[%s732 + $0x14] sm:$0xf]
    %v739 = vld [vmem:[%s732 + $0x18] sm:$0xf]
    %v740 = vld [vmem:[%s732 + $0x1c] sm:$0xf]
    %v741 = vld [vmem:[%s732 + $0x20] sm:$0xf]
    %v742 = vld [vmem:[%s732 + $0x24] sm:$0xf]
    %v743 = vld [vmem:[%s732 + $0x28] sm:$0xf]
    %v744 = vld [vmem:[%s732 + $0x2c] sm:$0xf]
    %v745 = vld [vmem:[%s732 + $0x30] sm:$0xf]
    %v746 = vld [vmem:[%s732 + $0x34] sm:$0xf]
    %v747 = vld [vmem:[%s732 + $0x38] sm:$0xf]
    %v748 = vld [vmem:[%s732 + $0x3c] sm:$0xf]
    %s749 = scalar_lea.vmem %s4, 1
    %v750 = vld [vmem:[%s749] sm:$0x1]
    %v752 = vlaneseq
    %v753 = vshrl.u32 %v752, 7
    %v754 = vsub.s32 0, %v753
    %v755 = vrot.slane %v750, %v754
    %v773 = vunpack.c.l.b16 %v733
    %v774 = vunpack.c.l.b16 %v734
    %v775 = vunpack.c.l.b16 %v735
    %v776 = vunpack.c.l.b16 %v736
    %v777 = vunpack.c.l.b16 %v737
    %v778 = vunpack.c.l.b16 %v738
    %v779 = vunpack.c.l.b16 %v739
    %v780 = vunpack.c.l.b16 %v740
    %v781 = vunpack.c.l.b16 %v741
    %v782 = vunpack.c.l.b16 %v742
    %v783 = vunpack.c.l.b16 %v743
    %v784 = vunpack.c.l.b16 %v744
    %v785 = vunpack.c.l.b16 %v745
    %v786 = vunpack.c.l.b16 %v746
    %v787 = vunpack.c.l.b16 %v747
    %v788 = vunpack.c.l.b16 %v748
    %v789 = vpack.c.b16 %v774, %v773
    %v790 = vpack.c.b16 %v776, %v775
    %v791 = vpack.c.b16 %v778, %v777
    %v792 = vpack.c.b16 %v780, %v779
    %v793 = vpack.c.b16 %v782, %v781
    %v794 = vpack.c.b16 %v784, %v783
    %v795 = vpack.c.b16 %v786, %v785
    %v796 = vpack.c.b16 %v788, %v787
    %805 = vmatprep.subr.bf16.mxu0 0
    %806 = vmatpush1.bf16.msra.mxu0 %v789
    %807 = vmatprep.subr.bf16.mxu0 0
    %808 = vmatpush1.bf16.msra.mxu0 %v790
    %809 = vmatprep.subr.bf16.mxu0 0
    %810 = vmatpush1.bf16.msra.mxu0 %v791
    %811 = vmatprep.subr.bf16.mxu0 0
    %812 = vmatpush1.bf16.msra.mxu0 %v792
    %813 = vmatprep.subr.bf16.mxu0 0
    %814 = vmatpush1.bf16.msra.mxu0 %v793
    %815 = vmatprep.subr.bf16.mxu0 0
    %816 = vmatpush1.bf16.msra.mxu0 %v794
    %817 = vmatprep.subr.bf16.mxu0 0
    %818 = vmatpush1.bf16.msra.mxu0 %v795
    %819 = vmatprep.subr.bf16.mxu0 0
    %820 = vmatpush1.bf16.msra.mxu0 %v796
    %821 = vmatprep.subr.bf16.mxu0 0
    %822 = vmatpush1.bf16.msra.mxu0 0
    %823 = vmatprep.subr.bf16.mxu0 0
    %824 = vmatpush1.bf16.msra.mxu0 0
    %825 = vmatprep.subr.bf16.mxu0 0
    %826 = vmatpush1.bf16.msra.mxu0 0
    %827 = vmatprep.subr.bf16.mxu0 0
    %828 = vmatpush1.bf16.msra.mxu0 0
    %829 = vmatprep.subr.bf16.mxu0 0
    %830 = vmatpush1.bf16.msra.mxu0 0
    %831 = vmatprep.subr.bf16.mxu0 0
    %832 = vmatpush1.bf16.msra.mxu0 0
    %833 = vmatprep.subr.bf16.mxu0 0
    %834 = vmatpush1.bf16.msra.mxu0 0
    %835 = vmatprep.subr.bf16.mxu0 0
    %836 = vmatpush1.bf16.msra.mxu0 0
    %837 = vmatprep.mubr.bf16.mxu0 0
    %838 = vmatmul.mubr.bf16.gmra.mrb[0].mxu0 %v731
    %v839 = vpop.f32.mrb[0].mxu0
    %v840 = vadd.f32 %v755, %v839
    %v841 = vpop.f32.mrb[0].mxu0
    %v842 = vpop.f32.mrb[0].mxu0
    %v843 = vpop.f32.mrb[0].mxu0
    %844 = vdwg.mxu0
    %v845 = vmax.f32 %v840, 0.0
    %v846 = vadd.f32 %v845, %v730
    %v847 = vpack.c.bf16 %v846, %v846
    %v848 = vld [vmem:[#allocation8] sm:$0xf]
    %v849 = vld [vmem:[#allocation8 + $0x4] sm:$0xf]
    %v850 = vld [vmem:[#allocation8 + $0x8] sm:$0xf]
    %v851 = vld [vmem:[#allocation8 + $0xc] sm:$0xf]
    %v852 = vld [vmem:[#allocation8 + $0x10] sm:$0xf]
    %v853 = vld [vmem:[#allocation8 + $0x14] sm:$0xf]
    %v854 = vld [vmem:[#allocation8 + $0x18] sm:$0xf]
    %v855 = vld [vmem:[#allocation8 + $0x1c] sm:$0xf]
    %v856 = vld [vmem:[#allocation8 + $0x20] sm:$0xf]
    %v857 = vld [vmem:[#allocation8 + $0x24] sm:$0xf]
    %v858 = vld [vmem:[#allocation8 + $0x28] sm:$0xf]
    %v859 = vld [vmem:[#allocation8 + $0x2c] sm:$0xf]
    %v860 = vld [vmem:[#allocation8 + $0x30] sm:$0xf]
    %v861 = vld [vmem:[#allocation8 + $0x34] sm:$0xf]
    %v862 = vld [vmem:[#allocation8 + $0x38] sm:$0xf]
    %v863 = vld [vmem:[#allocation8 + $0x3c] sm:$0xf]
    %v864 = vld [vmem:[%s6] sm:$0x1]
    %v866 = vlaneseq
    %v867 = vshrl.u32 %v866, 7
    %v868 = vsub.s32 0, %v867
    %v869 = vrot.slane %v864, %v868
    %v887 = vunpack.c.l.b16 %v848
    %v888 = vunpack.c.l.b16 %v849
    %v889 = vunpack.c.l.b16 %v850
    %v890 = vunpack.c.l.b16 %v851
    %v891 = vunpack.c.l.b16 %v852
    %v892 = vunpack.c.l.b16 %v853
    %v893 = vunpack.c.l.b16 %v854
    %v894 = vunpack.c.l.b16 %v855
    %v895 = vunpack.c.l.b16 %v856
    %v896 = vunpack.c.l.b16 %v857
    %v897 = vunpack.c.l.b16 %v858
    %v898 = vunpack.c.l.b16 %v859
    %v899 = vunpack.c.l.b16 %v860
    %v900 = vunpack.c.l.b16 %v861
    %v901 = vunpack.c.l.b16 %v862
    %v902 = vunpack.c.l.b16 %v863
    %v903 = vpack.c.b16 %v888, %v887
    %v904 = vpack.c.b16 %v890, %v889
    %v905 = vpack.c.b16 %v892, %v891
    %v906 = vpack.c.b16 %v894, %v893
    %v907 = vpack.c.b16 %v896, %v895
    %v908 = vpack.c.b16 %v898, %v897
    %v909 = vpack.c.b16 %v900, %v899
    %v910 = vpack.c.b16 %v902, %v901
    %919 = vmatprep.subr.bf16.mxu0 0
    %920 = vmatpush1.bf16.msra.mxu0 %v903
    %921 = vmatprep.subr.bf16.mxu0 0
    %922 = vmatpush1.bf16.msra.mxu0 %v904
    %923 = vmatprep.subr.bf16.mxu0 0
    %924 = vmatpush1.bf16.msra.mxu0 %v905
    %925 = vmatprep.subr.bf16.mxu0 0
    %926 = vmatpush1.bf16.msra.mxu0 %v906
    %927 = vmatprep.subr.bf16.mxu0 0
    %928 = vmatpush1.bf16.msra.mxu0 %v907
    %929 = vmatprep.subr.bf16.mxu0 0
    %930 = vmatpush1.bf16.msra.mxu0 %v908
    %931 = vmatprep.subr.bf16.mxu0 0
    %932 = vmatpush1.bf16.msra.mxu0 %v909
    %933 = vmatprep.subr.bf16.mxu0 0
    %934 = vmatpush1.bf16.msra.mxu0 %v910
    %935 = vmatprep.subr.bf16.mxu0 0
    %936 = vmatpush1.bf16.msra.mxu0 0
    %937 = vmatprep.subr.bf16.mxu0 0
    %938 = vmatpush1.bf16.msra.mxu0 0
    %939 = vmatprep.subr.bf16.mxu0 0
    %940 = vmatpush1.bf16.msra.mxu0 0
    %941 = vmatprep.subr.bf16.mxu0 0
    %942 = vmatpush1.bf16.msra.mxu0 0
    %943 = vmatprep.subr.bf16.mxu0 0
    %944 = vmatpush1.bf16.msra.mxu0 0
    %945 = vmatprep.subr.bf16.mxu0 0
    %946 = vmatpush1.bf16.msra.mxu0 0
    %947 = vmatprep.subr.bf16.mxu0 0
    %948 = vmatpush1.bf16.msra.mxu0 0
    %949 = vmatprep.subr.bf16.mxu0 0
    %950 = vmatpush1.bf16.msra.mxu0 0
    %951 = vmatprep.mubr.bf16.mxu0 0
    %952 = vmatmul.mubr.bf16.gmra.mrb[0].mxu0 %v847
    %v953 = vpop.f32.mrb[0].mxu0
    %v954 = vadd.f32 %v869, %v953
    %v955 = vpop.f32.mrb[0].mxu0
    %v956 = vpop.f32.mrb[0].mxu0
    %v957 = vpop.f32.mrb[0].mxu0
    %958 = vdwg.mxu0
    %959 = vst [vmem:[#allocation10] sm:$0xff] %v954
    // Predicated region
    $region46: #{tpu_custom_call.1} parent=1 // pred_check
      _
    $region47: #{tpu_custom_call.1} parent=1 // pred_check_branch
      %961 = sbr.rel (0) target = $region49
    $region48: #{tpu_custom_call.1} parent=1 // pred_region
      %s963 = ssub.s32 128, 128
      %964 = vsyncadd [#allocation4], %s963
      %s966 = sshll.u32 [#allocation10], 4
      %s967 = int_to_ptr.vmem [resolvable:$true] %s966
      %969 = dma.vmem_to_hbm [thread:$0]  %s967, 128, %s7, [#allocation4]
    $region49: #{tpu_custom_call.1} parent=1 // pred_fallthru
      _
    // Predicated region
    $region50: #{tpu_custom_call.1} parent=1 // pred_check
      _
    $region51: #{tpu_custom_call.1} parent=1 // pred_check_branch
      %971 = sbr.rel (0) target = $region53
    $region52: #{tpu_custom_call.1} parent=1 // pred_region
      %972 = dma.done [#allocation4], 128
    $region53: #{tpu_custom_call.1} parent=1 // pred_fallthru
      _
    %973 = vsyncpa [#allocation3], 1
    %974 = vsyncpa [#allocation6], 1
    %975 = vsyncpa [#allocation9], 1
    %976 = vsyncpa [#allocation4], 1

</llo_original>
